<compile_context>
chip_gen: v7x
topology: tpu7x:2x2x1
jax: 0.10.0
libtpu: 0.0.40
codegen_flags: <defaults>
</compile_context>

<pallas_src>
import functools

import jax
import jax.numpy as jnp
from jax.experimental import pallas as pl
from jax.experimental.pallas import tpu as pltpu

VMEM = pltpu.MemorySpace.VMEM
SMEM = pltpu.MemorySpace.SMEM
_F32 = jnp.float32
_BF16 = jnp.bfloat16


def _round_up(x, m):
    return (x + m - 1) // m * m


def _pick_tile(dim, candidates):
    for c in candidates:
        if dim % c == 0:
            return c
    return candidates[-1]


# ----------------------------------------------------------------------------
# Tiled GEMM kernels (grid = (Cout tiles, M tiles, K tiles)), bf16 MXU inputs,
# f32 VMEM accumulator, bias + activation fused into the k==last epilogue.
# ----------------------------------------------------------------------------
def _gemm_kernel(x_ref, w_ref, b_ref, o_ref, acc_ref, *, act, nk):
    k = pl.program_id(2)

    @pl.when(k == 0)
    def _init():
        acc_ref[...] = jnp.zeros_like(acc_ref)

    acc_ref[...] += jnp.dot(x_ref[...], w_ref[...],
                            preferred_element_type=jnp.float32)

    @pl.when(k == nk - 1)
    def _finalize():
        y = acc_ref[...] + b_ref[...]            # epilogue stays in f32 (v5e-safe)
        if act == "lrelu":
            y = jnp.where(y > 0, y, 0.2 * y)
        elif act == "relu":
            y = jnp.maximum(y, 0.0)
        o_ref[...] = y.astype(o_ref.dtype)


def _gemm_stats_kernel(x_ref, w_ref, b_ref, o_ref, sum_ref, sq_ref, acc_ref, *, nk):
    # Same GEMM, plus fused per-output-channel sum / sum-of-squares (BatchNorm
    # batch statistics) accumulated in resident output blocks across the M and
    # K grid axes -> the activation is never re-read from HBM for BN stats.
    i = pl.program_id(1)
    k = pl.program_id(2)

    @pl.when(jnp.logical_and(i == 0, k == 0))
    def _init_stats():
        sum_ref[...] = jnp.zeros_like(sum_ref)
        sq_ref[...] = jnp.zeros_like(sq_ref)

    @pl.when(k == 0)
    def _init_acc():
        acc_ref[...] = jnp.zeros_like(acc_ref)

    acc_ref[...] += jnp.dot(x_ref[...], w_ref[...],
                            preferred_element_type=jnp.float32)

    @pl.when(k == nk - 1)
    def _finalize():
        y = acc_ref[...] + b_ref[...]
        o_ref[...] = y.astype(o_ref.dtype)
        sum_ref[...] += jnp.sum(y, axis=0, keepdims=True)
        sq_ref[...] += jnp.sum(y * y, axis=0, keepdims=True)


def conv_gemm(x, w, b, act="none", with_stats=False, out_dtype=_BF16):
    """x: (M, K) patches, w: (K, Cout), b: (Cout,).  Returns the lane-padded
    (Mp, Np) output (and (1, Np) column sum / sum-of-squares if with_stats)."""
    M, K = x.shape
    K2, Cout = w.shape
    assert K == K2
    Mp = _round_up(M, 128)
    Kp = _round_up(K, 128)
    Np = _round_up(Cout, 128)       # lane-dense output, even for Cout == 1
    tm = _pick_tile(Mp, (256, 128))
    tn = _pick_tile(Np, (256, 128))
    tk = _pick_tile(Kp, (512, 256, 128))
    nk = Kp // tk

    xp = jnp.pad(x.astype(_BF16), ((0, Mp - M), (0, Kp - K)))
    wp = jnp.pad(w.astype(_BF16), ((0, Kp - K), (0, Np - Cout)))
    bp = jnp.pad(b.astype(_F32).reshape(1, Cout), ((0, 0), (0, Np - Cout)))

    grid = (Np // tn, Mp // tm, nk)
    in_specs = [
        pl.BlockSpec((tm, tk), lambda j, i, k: (i, k)),
        pl.BlockSpec((tk, tn), lambda j, i, k: (k, j)),
        pl.BlockSpec((1, tn), lambda j, i, k: (0, j)),
    ]
    if with_stats:
        kernel = functools.partial(_gemm_stats_kernel, nk=nk)
        out_shape = (jax.ShapeDtypeStruct((Mp, Np), out_dtype),
                     jax.ShapeDtypeStruct((1, Np), _F32),
                     jax.ShapeDtypeStruct((1, Np), _F32))
        out_specs = (pl.BlockSpec((tm, tn), lambda j, i, k: (i, j)),
                     pl.BlockSpec((1, tn), lambda j, i, k: (0, j)),
                     pl.BlockSpec((1, tn), lambda j, i, k: (0, j)))
        # stats accumulate across the M (i) and K (k) axes -> arbitrary there.
        sem = ("parallel", "arbitrary", "arbitrary")
    else:
        kernel = functools.partial(_gemm_kernel, act=act, nk=nk)
        out_shape = jax.ShapeDtypeStruct((Mp, Np), out_dtype)
        out_specs = pl.BlockSpec((tm, tn), lambda j, i, k: (i, j))
        sem = ("parallel", "parallel", "arbitrary")

    # Tiles are a few hundred KiB (double-buffered), far below the default
    # scoped-VMEM limit on v5e/v6e/v7x, so no vmem_limit_bytes override.
    return pl.pallas_call(
        kernel,
        out_shape=out_shape,
        grid=grid,
        in_specs=in_specs,
        out_specs=out_specs,
        scratch_shapes=[pltpu.VMEM((tm, tn), _F32)],
        compiler_params=pltpu.CompilerParams(dimension_semantics=sem),
    )(xp, wp, bp)


# ----------------------------------------------------------------------------
# Folded-BatchNorm affine + LeakyReLU(0.2), gridded over M (lane-dense Np).
# ----------------------------------------------------------------------------
def _affine_lrelu_kernel(x_ref, s_ref, t_ref, o_ref):
    y = x_ref[...].astype(_F32) * s_ref[...] + t_ref[...]
    o_ref[...] = jnp.where(y > 0, y, 0.2 * y).astype(o_ref.dtype)


def affine_lrelu(x_pad, scale_pad, shift_pad):
    Mp, Np = x_pad.shape
    tm = _pick_tile(Mp, (512, 256, 128))
    return pl.pallas_call(
        _affine_lrelu_kernel,
        out_shape=jax.ShapeDtypeStruct((Mp, Np), x_pad.dtype),
        grid=(Mp // tm,),
        in_specs=[pl.BlockSpec((tm, Np), lambda i: (i, 0)),
                  pl.BlockSpec((1, Np), lambda i: (0, 0)),
                  pl.BlockSpec((1, Np), lambda i: (0, 0))],
        out_specs=pl.BlockSpec((tm, Np), lambda i: (i, 0)),
        compiler_params=pltpu.CompilerParams(dimension_semantics=("parallel",)),
    )(x_pad, scale_pad.reshape(1, Np).astype(_F32),
      shift_pad.reshape(1, Np).astype(_F32))


# ----------------------------------------------------------------------------
# Gridded scalar reductions on lane-dense (rows, 128) blocks with a resident
# VMEM accumulator (pl.when init on step 0).
# ----------------------------------------------------------------------------
def _sum_abs_diff_kernel(x_ref, r_ref, o_ref):
    @pl.when(pl.program_id(0) == 0)
    def _init():
        o_ref[...] = jnp.zeros_like(o_ref)
    o_ref[...] += jnp.sum(jnp.abs(x_ref[...] - r_ref[...]))


def _kl_sum_kernel(mu_ref, lv_ref, o_ref):
    @pl.when(pl.program_id(0) == 0)
    def _init():
        o_ref[...] = jnp.zeros_like(o_ref)
    mu = mu_ref[...]
    lv = lv_ref[...]
    o_ref[...] += 0.5 * jnp.sum(mu * mu + jnp.exp(lv) - 1.0 - lv)


def _to_lane_rows(x):
    """Flatten to a zero-padded, lane-dense (rows, 128) f32 matrix."""
    flat = x.reshape(-1).astype(_F32)
    n = flat.shape[0]
    rows = _round_up(max(_round_up(n, 128) // 128, 8), 8)
    return jnp.pad(flat, (0, rows * 128 - n)).reshape(rows, 128)


def _gridded_reduce(kernel, *arrays):
    rows = arrays[0].shape[0]
    tr = _pick_tile(rows, (512, 256, 128, 64, 32, 16, 8))
    out = pl.pallas_call(
        kernel,
        out_shape=jax.ShapeDtypeStruct((8, 128), _F32),
        grid=(rows // tr,),
        in_specs=[pl.BlockSpec((tr, 128), lambda i: (i, 0)) for _ in arrays],
        out_specs=pl.BlockSpec((8, 128), lambda i: (0, 0)),
        compiler_params=pltpu.CompilerParams(dimension_semantics=("arbitrary",)),
    )(*arrays)
    return out[0, 0]


def sum_abs_diff(x, r):
    # zero padding is neutral: |0 - 0| == 0
    return _gridded_reduce(_sum_abs_diff_kernel, _to_lane_rows(x), _to_lane_rows(r))


def kl_sum(mean, logvar):
    # zero padding is neutral: 0.5*(0 + e^0 - 1 - 0) == 0
    return _gridded_reduce(_kl_sum_kernel, _to_lane_rows(mean), _to_lane_rows(logvar))


# ----------------------------------------------------------------------------
# LPIPS stage: consumes the padded conv-GEMM feature output directly
# (rows = (sample, pixel), lanes = Cpad=128; padded channels are exactly 0),
# grid over samples, resident accumulator (sum over samples of spatial mean).
# ----------------------------------------------------------------------------
def _lpips_stage_kernel(fx_ref, fy_ref, w_ref, o_ref, *, hw):
    @pl.when(pl.program_id(0) == 0)
    def _init():
        o_ref[...] = jnp.zeros_like(o_ref)
    fx = fx_ref[...].astype(_F32)
    fy = fy_ref[...].astype(_F32)
    # LPIPS channel normalization: x / (||x||_2 + eps)
    nx = fx / (jnp.sqrt(jnp.sum(fx * fx, axis=-1, keepdims=True)) + 1e-10)
    ny = fy / (jnp.sqrt(jnp.sum(fy * fy, axis=-1, keepdims=True)) + 1e-10)
    d = (nx - ny) ** 2
    # 1x1 "lin" conv + spatial mean, accumulated over samples.
    o_ref[...] += jnp.sum(d * w_ref[...]) * (1.0 / hw)


def lpips_stage_sum(feat_flat, lin_w, n, hw):
    """feat_flat: lane-padded (>= 2*n*hw, Cpad) conv features, x-half rows
    first then y-half.  Returns sum over the n samples of the spatial mean."""
    Cp = feat_flat.shape[1]
    c = lin_w.shape[0]
    wp = jnp.pad(lin_w.astype(_F32).reshape(1, c), ((0, 0), (0, Cp - c)))
    out = pl.pallas_call(
        functools.partial(_lpips_stage_kernel, hw=hw),
        out_shape=jax.ShapeDtypeStruct((8, 128), _F32),
        grid=(n,),
        in_specs=[pl.BlockSpec((hw, Cp), lambda i: (i, 0)),
                  pl.BlockSpec((hw, Cp), lambda i: (n + i, 0)),
                  pl.BlockSpec((1, Cp), lambda i: (0, 0))],
        out_specs=pl.BlockSpec((8, 128), lambda i: (0, 0)),
        compiler_params=pltpu.CompilerParams(dimension_semantics=("arbitrary",)),
    )(feat_flat, feat_flat, wp)
    return out[0, 0]


# ----------------------------------------------------------------------------
# Logit reductions: tiny tensors, compute only the sums each path needs.
# ----------------------------------------------------------------------------
def _gen_logit_kernel(f_ref, o_ref):
    o_ref[0] = jnp.sum(f_ref[...])


def gen_logit_sum(logits_fake):
    f = logits_fake.reshape(logits_fake.shape[0], -1).astype(_F32)
    return pl.pallas_call(
        _gen_logit_kernel,
        out_shape=jax.ShapeDtypeStruct((1,), _F32),
        in_specs=[pl.BlockSpec(memory_space=VMEM)],
        out_specs=pl.BlockSpec(memory_space=SMEM),
    )(f)[0]


def _softplus(x):
    return jnp.maximum(x, 0.0) + jnp.log1p(jnp.exp(-jnp.abs(x)))


def _disc_logit_kernel(r_ref, f_ref, o_ref, *, loss_type):
    r = r_ref[...]
    f = f_ref[...]
    if loss_type == "hinge":
        o_ref[0] = jnp.sum(jnp.maximum(1.0 - r, 0.0))
        o_ref[1] = jnp.sum(jnp.maximum(1.0 + f, 0.0))
    else:  # vanilla
        o_ref[0] = jnp.sum(_softplus(-r))
        o_ref[1] = jnp.sum(_softplus(f))
    o_ref[2] = jnp.sum(r)
    o_ref[3] = jnp.sum(f)


def disc_logit_sums(logits_real, logits_fake, loss_type):
    r = logits_real.reshape(logits_real.shape[0], -1).astype(_F32)
    f = logits_fake.reshape(logits_fake.shape[0], -1).astype(_F32)
    return pl.pallas_call(
        functools.partial(_disc_logit_kernel, loss_type=loss_type),
        out_shape=jax.ShapeDtypeStruct((4,), _F32),
        in_specs=[pl.BlockSpec(memory_space=VMEM)] * 2,
        out_specs=pl.BlockSpec(memory_space=SMEM),
    )(r, f)


# ----------------------------------------------------------------------------
# Conv glue (NHWC end-to-end; GEMM hot path in Pallas)
# ----------------------------------------------------------------------------
def im2col_nhwc(x, kh, kw, stride, pad):
    # TODO(synk): patch extraction is still materialized by XLA (kh*kw slices
    # concatenated channels-last); a fully in-kernel strided-DMA im2col would
    # remove this extra HBM traffic.
    N, H, W, C = x.shape
    xp = jnp.pad(x, ((0, 0), (pad, pad), (pad, pad), (0, 0)))
    Ho = (H + 2 * pad - kh) // stride + 1
    Wo = (W + 2 * pad - kw) // stride + 1
    cols = []
    for i in range(kh):
        for j in range(kw):
            cols.append(xp[:, i:i + stride * Ho:stride, j:j + stride * Wo:stride, :])
    patches = jnp.concatenate(cols, axis=-1)             # (N, Ho, Wo, kh*kw*C)
    return patches.reshape(N * Ho * Wo, kh * kw * C), Ho, Wo


def conv2d_nhwc(x, w_torch, b, stride, pad, act="none", bn=None,
                return_flat=False, out_dtype=_BF16):
    """PyTorch-equivalent Conv2d on NHWC activations (weight kept in torch
    (Cout, Cin, kh, kw) layout) via the tiled Pallas GEMM; optional fused
    BatchNorm(training) + LeakyReLU(0.2)."""
    N, H, W, Cin = x.shape
    Cout, Cin2, kh, kw = w_torch.shape
    assert Cin == Cin2
    cols, Ho, Wo = im2col_nhwc(x, kh, kw, stride, pad)
    M = cols.shape[0]
    wm = jnp.transpose(w_torch, (2, 3, 1, 0)).reshape(kh * kw * Cin, Cout)
    if bn is None:
        y_pad = conv_gemm(cols, wm, b, act=act, out_dtype=out_dtype)
    else:
        # bias is zero for BN convs, so zero-padded rows contribute 0 to stats.
        y_pad, csum, csq = conv_gemm(cols, wm, b, with_stats=True,
                                     out_dtype=out_dtype)
        gamma, beta = bn
        mean = csum[0, :Cout] / M
        var = csq[0, :Cout] / M - mean * mean
        scale = gamma.astype(_F32) * jax.lax.rsqrt(var + 1e-5)
        shift = beta.astype(_F32) - mean * scale
        Np = y_pad.shape[1]
        y_pad = affine_lrelu(y_pad,
                             jnp.pad(scale, (0, Np - Cout)),
                             jnp.pad(shift, (0, Np - Cout)))
    y = y_pad[:M, :Cout].reshape(N, Ho, Wo, Cout)
    if return_flat:
        return y, y_pad, (Ho, Wo)
    return y


# ----------------------------------------------------------------------------
# Parameter init (deterministic, synthetic)
# ----------------------------------------------------------------------------
def init_discriminator_params(key, input_nc=3, ndf=64, n_layers=3):
    ks = jax.random.split(key, 2 * n_layers + 2)
    p = {"w0": 0.02 * jax.random.normal(ks[0], (ndf, input_nc, 4, 4), _F32),
         "b0": jnp.zeros((ndf,), _F32)}
    prev = ndf
    for n in range(1, n_layers + 1):
        out = ndf * min(2 ** n, 8)
        p[f"w{n}"] = 0.02 * jax.random.normal(ks[n], (out, prev, 4, 4), _F32)
        p[f"g{n}"] = 1.0 + 0.02 * jax.random.normal(ks[n_layers + n], (out,), _F32)
        p[f"be{n}"] = jnp.zeros((out,), _F32)
        prev = out
    p["w_out"] = 0.02 * jax.random.normal(ks[-1], (1, prev, 4, 4), _F32)
    p["b_out"] = jnp.zeros((1,), _F32)
    return p


def init_lpips_params(key):
    ks = jax.random.split(key, 4)
    return {
        "shift": jnp.array([-0.030, -0.088, -0.188], _F32),
        "scale": jnp.array([0.458, 0.448, 0.450], _F32),
        "conv1_w": 0.1 * jax.random.normal(ks[0], (8, 3, 3, 3), _F32),
        "conv1_b": jnp.zeros((8,), _F32),
        "conv2_w": 0.1 * jax.random.normal(ks[1], (16, 8, 3, 3), _F32),
        "conv2_b": jnp.zeros((16,), _F32),
        "lin1": jnp.abs(0.1 * jax.random.normal(ks[2], (8,), _F32)),
        "lin2": jnp.abs(0.1 * jax.random.normal(ks[3], (16,), _F32)),
    }


class DiagonalGaussianPosterior:
    def __init__(self, mean, logvar):
        self.mean = mean
        self.logvar = logvar


# ----------------------------------------------------------------------------
# LPIPSWithDiscriminator (forward pass)
# ----------------------------------------------------------------------------
class LPIPSWithDiscriminatorPallas:
    def __init__(self, disc_start, key, logvar_init=0.0, kl_weight=1.0,
                 pixelloss_weight=1.0, disc_num_layers=3, disc_in_channels=3,
                 disc_factor=1.0, disc_weight=1.0, perceptual_weight=1.0,
                 disc_conditional=False, disc_loss="hinge"):
        assert disc_loss in ["hinge", "vanilla"]
        self.kl_weight = kl_weight
        self.pixel_weight = pixelloss_weight
        self.perceptual_weight = perceptual_weight
        # TODO(synk): logvar is a learnable nn.Parameter in the reference.
        self.logvar = jnp.array(logvar_init, _F32)
        self.discriminator_iter_start = disc_start
        self.disc_factor = disc_factor
        self.discriminator_weight = disc_weight
        self.disc_conditional = disc_conditional
        self.disc_loss_type = disc_loss
        self.disc_num_layers = disc_num_layers
        k_disc, k_lpips = jax.random.split(key)
        self.disc_params = init_discriminator_params(
            k_disc, input_nc=disc_in_channels, n_layers=disc_num_layers)
        # TODO(synk): true LPIPS uses a pretrained VGG16; a deterministic
        # synthetic 2-stage perceptual feature net stands in (same math shape).
        self.lpips_params = init_lpips_params(k_lpips)

    # --- perceptual loss: sum over samples of the per-sample LPIPS distance
    def perceptual_loss_sum(self, x_nhwc, y_nhwc):
        p = self.lpips_params
        sh = p["shift"].reshape(1, 1, 1, 3)
        sc = p["scale"].reshape(1, 1, 1, 3)
        n = x_nhwc.shape[0]
        # x and y share the frozen feature weights (no BatchNorm): run both
        # halves through each conv in a single GEMM (weights resident once,
        # M doubled -> fuller MXU tiles, half the kernel launches).
        z = jnp.concatenate([(x_nhwc - sh) / sc, (y_nhwc - sh) / sc], axis=0)
        f1, f1_flat, (h1, w1) = conv2d_nhwc(z, p["conv1_w"], p["conv1_b"], 2, 1,
                                            act="relu", return_flat=True)
        _, f2_flat, (h2, w2) = conv2d_nhwc(f1, p["conv2_w"], p["conv2_b"], 2, 1,
                                           act="relu", return_flat=True)
        return (lpips_stage_sum(f1_flat, p["lin1"], n, h1 * w1) +
                lpips_stage_sum(f2_flat, p["lin2"], n, h2 * w2))

    # --- NLayerDiscriminator (PatchGAN), BatchNorm in training mode, NHWC
    def discriminator(self, x_nhwc):
        p = self.disc_params
        h = conv2d_nhwc(x_nhwc, p["w0"], p["b0"], 2, 1, act="lrelu")
        for n in range(1, self.disc_num_layers + 1):
            stride = 2 if n < self.disc_num_layers else 1
            cout = p[f"w{n}"].shape[0]
            h = conv2d_nhwc(h, p[f"w{n}"], jnp.zeros((cout,), _F32), stride, 1,
                            bn=(p[f"g{n}"], p[f"be{n}"]))
        return conv2d_nhwc(h, p["w_out"], p["b_out"], 1, 1, act="none",
                           out_dtype=_F32)                 # (N, Hf, Wf, 1)

    def forward(self, inputs, reconstructions, posteriors, optimizer_idx,
                global_step, last_layer=None, cond=None, split="train",
                weights=None):
        assert weights is None  # TODO(synk): per-element `weights` not wired into the Pallas reduction
        N = inputs.shape[0]
        D = inputs.size // N

        x_nhwc = jnp.transpose(inputs, (0, 2, 3, 1))
        r_nhwc = jnp.transpose(reconstructions, (0, 2, 3, 1))

        # rec_loss = |x - xhat| + w_p * p_loss (p_loss broadcast per sample).
        # Only global sums are needed downstream, so the O(1) scalar algebra
        # (exp(logvar), per-sample broadcast counts) is hoisted out of kernels.
        abs_sum = sum_abs_diff(inputs, reconstructions)
        if self.perceptual_weight > 0:
            p_sum = self.perceptual_loss_sum(x_nhwc, r_nhwc)
            rec_sum = abs_sum + self.perceptual_weight * D * p_sum
        else:
            rec_sum = abs_sum
        nll_sum = jnp.exp(-self.logvar) * rec_sum + self.logvar * (N * D)
        nll_loss = nll_sum / N
        weighted_nll_loss = nll_loss
        rec_loss_mean = rec_sum / (N * D)

        kl_loss = kl_sum(posteriors.mean, posteriors.logvar) / N

        disc_factor = (self.disc_factor
                       if global_step >= self.discriminator_iter_start else 0.0)

        if optimizer_idx == 0:
            if cond is None:
                assert not self.disc_conditional
                logits_fake = self.discriminator(r_nhwc)
            else:
                assert self.disc_conditional
                cond_nhwc = jnp.transpose(cond, (0, 2, 3, 1))
                logits_fake = self.discriminator(
                    jnp.concatenate([r_nhwc, cond_nhwc], axis=-1))
            cnt = float(logits_fake.size)
            g_loss = -gen_logit_sum(logits_fake) / cnt
            # calculate_adaptive_weight() in the reference early-returns 1.0.
            d_weight = jnp.array(1.0 if self.disc_factor > 0.0 else 0.0, _F32)
            loss = (weighted_nll_loss + self.kl_weight * kl_loss
                    + d_weight * disc_factor * g_loss)
            log = {f"{split}/total_loss": loss, f"{split}/logvar": self.logvar,
                   f"{split}/kl_loss": kl_loss, f"{split}/nll_loss": nll_loss,
                   f"{split}/rec_loss": rec_loss_mean,
                   f"{split}/d_weight": d_weight,
                   f"{split}/disc_factor": jnp.array(disc_factor, _F32),
                   f"{split}/g_loss": g_loss}
            return loss, log

        if optimizer_idx == 1:
            # real/fake are run through the discriminator in SEPARATE calls:
            # BatchNorm (training mode) uses per-call batch statistics, exactly
            # like the PyTorch reference, so batch-concatenation would change
            # the numerics.
            if cond is None:
                logits_real = self.discriminator(x_nhwc)
                logits_fake = self.discriminator(r_nhwc)
            else:
                cond_nhwc = jnp.transpose(cond, (0, 2, 3, 1))
                logits_real = self.discriminator(
                    jnp.concatenate([x_nhwc, cond_nhwc], axis=-1))
                logits_fake = self.discriminator(
                    jnp.concatenate([r_nhwc, cond_nhwc], axis=-1))
            cnt = float(logits_real.size)
            stats = disc_logit_sums(logits_real, logits_fake, self.disc_loss_type)
            d_loss = disc_factor * 0.5 * (stats[0] / cnt + stats[1] / cnt)
            log = {f"{split}/disc_loss": d_loss,
                   f"{split}/logits_real": stats[2] / cnt,
                   f"{split}/logits_fake": stats[3] / cnt}
            return d_loss, log


# ----------------------------------------------------------------------------
if __name__ == "__main__":
    key = jax.random.PRNGKey(0)
    k1, k2, k3, k4, k5 = jax.random.split(key, 5)

    # Spatial 32 so the 5-conv PatchGAN (3 stride-2 + 2 stride-1, k=4, p=1)
    # produces non-empty (N, 2, 2, 1) logits.
    inputs = jax.random.normal(k1, (2, 3, 32, 32), _F32)
    reconstructions = inputs + 0.1 * jax.random.normal(k2, (2, 3, 32, 32), _F32)
    post_mean = 0.1 * jax.random.normal(k3, (2, 4, 8, 8), _F32)
    post_logvar = 0.1 * jax.random.normal(k4, (2, 4, 8, 8), _F32)
    posterior = DiagonalGaussianPosterior(post_mean, post_logvar)

    model = LPIPSWithDiscriminatorPallas(disc_start=0, key=k5)

    loss_g, log_g = model.forward(inputs, reconstructions, posterior,
                                  optimizer_idx=0, global_step=1)
    loss_d, log_d = model.forward(inputs, reconstructions, posterior,
                                  optimizer_idx=1, global_step=1)
    jax.block_until_ready((loss_g, loss_d,
                           [v for v in log_g.values()],
                           [v for v in log_d.values()]))
    print("KERNEL_OK")
</pallas_src>

<mosaic_0001>
module attributes {stable_mosaic.version = 11 : i64} {
  func.func @_sum_abs_diff_kernel(%arg0: i32, %arg1: memref<16x128xf32, #tpu.memory_space<vmem>>, %arg2: memref<16x128xf32, #tpu.memory_space<vmem>>, %arg3: memref<8x128xf32, #tpu.memory_space<vmem>>) attributes {dimension_semantics = [#tpu.dimension_semantics<arbitrary>], iteration_bounds = array<i64: 3>, scalar_prefetch = 0 : i64, scratch_operands = 0 : i64, tpu.core_type = #tpu.core_type<tc>, window_params = [{transform_indices = @transform_0, window_bounds = array<i64: 16, 128>}, {transform_indices = @transform_1, window_bounds = array<i64: 16, 128>}, {pipeline_mode = #tpu.pipeline_mode<synchronous>, transform_indices = @transform_2, window_bounds = array<i64: 8, 128>}]} {
    %c0_i32 = arith.constant 0 : i32
    %0 = arith.cmpi eq, %arg0, %c0_i32 : i32
    %1 = arith.extui %0 : i1 to i32
    %c0_i32_0 = arith.constant 0 : i32
    %2 = arith.cmpi ne, %1, %c0_i32_0 : i32
    scf.if %2 {
      %cst_8 = arith.constant 0.000000e+00 : f32
      %15 = vector.broadcast %cst_8 : f32 to vector<8x128xf32>
      %c0_9 = arith.constant 0 : index
      %c0_10 = arith.constant 0 : index
      %16 = vector.load %arg3[%c0_9, %c0_10] : memref<8x128xf32, #tpu.memory_space<vmem>>, vector<8x128xf32>
      tpu.vector_store %arg3[%c0_9, %c0_10], %15 {strides = array<i32>} : memref<8x128xf32, #tpu.memory_space<vmem>>, vector<8x128xf32>,
    } else {
    }
    %c0 = arith.constant 0 : index
    %c0_1 = arith.constant 0 : index
    %3 = vector.load %arg3[%c0, %c0_1] : memref<8x128xf32, #tpu.memory_space<vmem>>, vector<8x128xf32>
    %c0_2 = arith.constant 0 : index
    %c0_3 = arith.constant 0 : index
    %4 = vector.load %arg1[%c0_2, %c0_3] : memref<16x128xf32, #tpu.memory_space<vmem>>, vector<16x128xf32>
    %c0_4 = arith.constant 0 : index
    %c0_5 = arith.constant 0 : index
    %5 = vector.load %arg2[%c0_4, %c0_5] : memref<16x128xf32, #tpu.memory_space<vmem>>, vector<16x128xf32>
    %6 = arith.subf %4, %5 : vector<16x128xf32>
    %7 = math.absf %6 : vector<16x128xf32>
    %8 = vector.shape_cast %7 : vector<16x128xf32> to vector<1x16x128xf32>
    %cst = arith.constant dense<0.000000e+00> : vector<1xf32>
    %9 = vector.multi_reduction <add>, %8, %cst [1, 2] : vector<1x16x128xf32> to vector<1xf32>
    %10 = vector.shape_cast %9 : vector<1xf32> to vector<1x1x1xf32>
    %11 = vector.extract %10[0, 0, 0] : f32 from vector<1x1x1xf32>
    %12 = vector.broadcast %11 : f32 to vector<8x128xf32>
    %13 = arith.addf %3, %12 : vector<8x128xf32>
    %c0_6 = arith.constant 0 : index
    %c0_7 = arith.constant 0 : index
    %14 = vector.load %arg3[%c0_6, %c0_7] : memref<8x128xf32, #tpu.memory_space<vmem>>, vector<8x128xf32>
    tpu.vector_store %arg3[%c0_6, %c0_7], %13 {strides = array<i32>} : memref<8x128xf32, #tpu.memory_space<vmem>>, vector<8x128xf32>,
    return
  }
  func.func @transform_0(%arg0: i32) -> (i32, i32) {
    %c0_i32 = arith.constant 0 : i32
    %c0_i32_0 = arith.constant 0 : i32
    return %arg0, %c0_i32 : i32, i32
  }
  func.func @transform_1(%arg0: i32) -> (i32, i32) {
    %c0_i32 = arith.constant 0 : i32
    %c0_i32_0 = arith.constant 0 : i32
    return %arg0, %c0_i32 : i32, i32
  }
  func.func @transform_2(%arg0: i32) -> (i32, i32) {
    %c0_i32 = arith.constant 0 : i32
    %c0_i32_0 = arith.constant 0 : i32
    %c0_i32_1 = arith.constant 0 : i32
    return %c0_i32, %c0_i32_0 : i32, i32
  }
}

</mosaic_0001>

<llo_original>
// kernel: tpu_custom_call.1
$region0: #{tpu_custom_call.1}
  #allocation0 [shape = 'u32[]', space=smem, size = 0x4, offset = 0x4, fixed_abs, tag = 'smem constant byte address 0x4 - core index']
  #allocation1 [shape = 'u32[144,128]{1,0:T(1,128)}', space=vmem, size = 0x12000, scoped, tag = 'internal scratch']
  %s0 = inlined_call_operand.hbm [shape: f32[48,128], index: 0, kind: input, shape index: {}]
  %s1 = inlined_call_operand.hbm [shape: f32[48,128], index: 1, kind: input, shape index: {}]
  %s2 = inlined_call_operand.hbm [shape: f32[8,128], index: 2, kind: output, shape index: {}]
  %s3 = sld [smem:[#allocation0]]
  $region53: #{tpu_custom_call.1} parent=0
    _
  %s5 = ssub.s32 1, %s3
  %s6 = scalar_select 0, %s5, %s3
  $region1: #{tpu_custom_call.1} parent=0
    #allocation2 [shape = 'u8[16384]{0}', space=vmem, size = 0x4000, scoped, tag = 'input window, operand 0']
    #allocation3 [shape = 's32[2]{0}', space=sflag, size = 0x8, scoped, tag = 'scoped memory for tpu_custom_call.1']
    #allocation4 [shape = 's32[2]{0}', space=sflag, size = 0x8, scoped, tag = 'scoped memory for tpu_custom_call.1']
    #allocation5 [shape = 'u8[16384]{0}', space=vmem, size = 0x4000, scoped, tag = 'input window, operand 1']
    #allocation6 [shape = 's32[2]{0}', space=sflag, size = 0x8, scoped, tag = 'scoped memory for tpu_custom_call.1']
    #allocation7 [shape = 'u8[4096]{0}', space=vmem, size = 0x1000, scoped, tag = 'output window, operand 0, single buffered']
    %7 = vsyncpa [#allocation3], 0
    %s8 = scalar_lea.sflag [#allocation3], 1
    %9 = vsyncpa %s8, 0
    %10 = vsyncpa [#allocation6], 0
    %s11 = scalar_lea.sflag [#allocation6], 1
    %12 = vsyncpa %s11, 0
    %13 = vsyncpa [#allocation4], 0
    loop: start=0, step=1, limit=5
    $region2: #{tpu_custom_call.1} parent=1 // loop_pre_header
      _
    $region3: #{tpu_custom_call.1} parent=1 // loop_header
      %s15 = sphi 0, %s19
      %p16 = scmp.ge.s32.totalorder %s15, 5
      %s25 = sphi 0, %s27
      %s28 = sphi 0, %s25
      %s29 = sphi 0, %s28
      %s45 = sphi 0, %s29
      %s51 = sphi 0, %s53
      %s54 = sphi 0, %s51
      %s55 = sphi 0, %s54
      %s71 = sphi 0, %s55
      %s75 = sphi 0, %s75
      %s77 = sphi 0, %s75
      %s78 = sphi 0, %s77
      %s92 = sphi 0, %s78
    $region4: #{tpu_custom_call.1} parent=1 // loop_header_branch
      %18 = sbr.rel (%p16) target = $region8
    $region5: #{tpu_custom_call.1} parent=1 // loop_body
      %s20 = ssub.s32 %s15, 1
      %s21 = ssub.s32 %s15, 2
      %s22 = sadd.s32 %s15, 1
      %s23 = ssub.s32 %s15, %s22
      %p24 = scmp.eq.s32.totalorder %s23, 0
      %s26 = sadd.s32 %s25, 1
      %s27 = scalar_select %p24, %s25, %s26
      %p30 = pneg %p24
      %p31 = scmp.eq.s32.totalorder %s15, 2
      %p32 = por %p30, %p31
      %p33 = scmp.ne.s32.totalorder %s25, %s28
      %p34 = scmp.eq.s32.totalorder %s15, 0
      %p35 = por %p33, %p34
      %p36 = scmp.ne.s32.totalorder %s25, %s28
      %p37 = scmp.eq.s32.totalorder %s20, 2
      %p38 = por %p36, %p37
      %p39 = scmp.ne.s32.totalorder %s28, %s29
      %p40 = scmp.eq.s32.totalorder %s20, 0
      %p41 = por %p39, %p40
      %p42 = scmp.ne.s32.totalorder %s28, %s29
      %p43 = scmp.eq.s32.totalorder %s21, 2
      %p44 = por %p42, %p43
      %p46 = scmp.ne.s32.totalorder %s29, %s45
      %p47 = scmp.eq.s32.totalorder %s21, 0
      %p48 = por %p46, %p47
      %s49 = ssub.s32 %s15, %s22
      %p50 = scmp.eq.s32.totalorder %s49, 0
      %s52 = sadd.s32 %s51, 1
      %s53 = scalar_select %p50, %s51, %s52
      %p56 = pneg %p50
      %p57 = scmp.eq.s32.totalorder %s15, 2
      %p58 = por %p56, %p57
      %p59 = scmp.ne.s32.totalorder %s51, %s54
      %p60 = scmp.eq.s32.totalorder %s15, 0
      %p61 = por %p59, %p60
      %p62 = scmp.ne.s32.totalorder %s51, %s54
      %p63 = scmp.eq.s32.totalorder %s20, 2
      %p64 = por %p62, %p63
      %p65 = scmp.ne.s32.totalorder %s54, %s55
      %p66 = scmp.eq.s32.totalorder %s20, 0
      %p67 = por %p65, %p66
      %p68 = scmp.ne.s32.totalorder %s54, %s55
      %p69 = scmp.eq.s32.totalorder %s21, 2
      %p70 = por %p68, %p69
      %p72 = scmp.ne.s32.totalorder %s55, %s71
      %p73 = scmp.eq.s32.totalorder %s21, 0
      %p74 = por %p72, %p73
      %s76 = sadd.s32 %s75, 1
      %p79 = scmp.eq.s32.totalorder %s15, 2
      %p80 = scmp.ne.s32.totalorder %s75, %s77
      %p81 = scmp.eq.s32.totalorder %s15, 0
      %p82 = por %p80, %p81
      %p83 = scmp.ne.s32.totalorder %s75, %s77
      %p84 = scmp.eq.s32.totalorder %s20, 2
      %p85 = por %p83, %p84
      %p86 = scmp.ne.s32.totalorder %s77, %s78
      %p87 = scmp.eq.s32.totalorder %s20, 0
      %p88 = por %p86, %p87
      %p89 = scmp.ne.s32.totalorder %s77, %s78
      %p90 = scmp.eq.s32.totalorder %s21, 2
      %p91 = por %p89, %p90
      %p93 = scmp.ne.s32.totalorder %s78, %s92
      %p94 = scmp.eq.s32.totalorder %s21, 0
      %p95 = por %p93, %p94
      %p96 = scmp.le.s32.totalorder 1, %s15
      %p97 = scmp.lt.s32.totalorder %s15, 4
      %p98 = pnand %p96, %p97
      %p99 = pneg %p98
      // Predicated region
      $region9: #{tpu_custom_call.1} parent=5 // pred_check
        _
      $region10: #{tpu_custom_call.1} parent=5 // pred_check_branch
        %101 = sbr.rel (%p98) target = $region12
      $region11: #{tpu_custom_call.1} parent=5 // pred_region
        %s102 = ssub.s32 %s15, 1
      $region12: #{tpu_custom_call.1} parent=5 // pred_fallthru
        _
      %p103 = scmp.lt.s32.totalorder %s15, 3
      // Predicated region
      $region13: #{tpu_custom_call.1} parent=5 // pred_check
        %p104 = pneg %p103
      $region14: #{tpu_custom_call.1} parent=5 // pred_check_branch
        %106 = sbr.rel (%p104) target = $region16
      $region15: #{tpu_custom_call.1} parent=5 // pred_region
        // Predicated region
        $region17: #{tpu_custom_call.1} parent=15 // pred_check
          %p107 = pneg %p35
        $region18: #{tpu_custom_call.1} parent=15 // pred_check_branch
          %109 = sbr.rel (%p107) target = $region20
        $region19: #{tpu_custom_call.1} parent=15 // pred_region
          %s110 = sand.u32 %s25, 1
          %s111 = scalar_lea.sflag [#allocation3], %s110
          %s112 = sand.u32 %s25, 1
          %s113 = smul.addr %s112, 16
          %s114 = scalar_lea.vmem [#allocation2], %s113
          %s115 = smul.u32 2, %s15
          %s117 = ssub.s32 256, 256
          %118 = vsyncadd %s111, %s117
          %s119 = smul.addr %s115, 128
          %s120 = scalar_lea.hbm %s0, %s119
          %s121 = sshll.u32 %s114, 4
          %s122 = int_to_ptr.vmem [resolvable:$true] %s121
          %127 = dma.hbm_to_vmem [thread:$0]  %s120, 256, %s122, %s111, 128, 128, 8
        $region20: #{tpu_custom_call.1} parent=15 // pred_fallthru
          _
        // Predicated region
        $region21: #{tpu_custom_call.1} parent=15 // pred_check
          %p128 = pneg %p61
        $region22: #{tpu_custom_call.1} parent=15 // pred_check_branch
          %130 = sbr.rel (%p128) target = $region24
        $region23: #{tpu_custom_call.1} parent=15 // pred_region
          %s131 = sand.u32 %s51, 1
          %s132 = scalar_lea.sflag [#allocation6], %s131
          %s133 = sand.u32 %s51, 1
          %s134 = smul.addr %s133, 16
          %s135 = scalar_lea.vmem [#allocation5], %s134
          %s136 = smul.u32 2, %s15
          %s138 = ssub.s32 256, 256
          %139 = vsyncadd %s132, %s138
          %s140 = smul.addr %s136, 128
          %s141 = scalar_lea.hbm %s1, %s140
          %s142 = sshll.u32 %s135, 4
          %s143 = int_to_ptr.vmem [resolvable:$true] %s142
          %148 = dma.hbm_to_vmem [thread:$0]  %s141, 256, %s143, %s132, 128, 128, 8
        $region24: #{tpu_custom_call.1} parent=15 // pred_fallthru
          _
      $region16: #{tpu_custom_call.1} parent=5 // pred_fallthru
        _
      %p149 = scmp.le.s32.totalorder 1, %s15
      %p150 = scmp.lt.s32.totalorder %s15, 4
      %p151 = pnand %p149, %p150
      %p152 = pneg %p151
      // Predicated region
      $region25: #{tpu_custom_call.1} parent=5 // pred_check
        _
      $region26: #{tpu_custom_call.1} parent=5 // pred_check_branch
        %154 = sbr.rel (%p151) target = $region28
      $region27: #{tpu_custom_call.1} parent=5 // pred_region
        %s155 = ssub.s32 %s15, 1
        %s156 = sand.u32 %s28, 1
        %s157 = scalar_lea.sflag [#allocation3], %s156
        %s158 = sand.u32 %s28, 1
        %s159 = smul.addr %s158, 16
        %s160 = scalar_lea.vmem [#allocation2], %s159
        // Predicated region
        $region29: #{tpu_custom_call.1} parent=27 // pred_check
          %p161 = pneg %p41
        $region30: #{tpu_custom_call.1} parent=27 // pred_check_branch
          %163 = sbr.rel (%p161) target = $region32
        $region31: #{tpu_custom_call.1} parent=27 // pred_region
          %164 = dma.done %s157, 256
        $region32: #{tpu_custom_call.1} parent=27 // pred_fallthru
          _
        %s165 = sand.u32 %s54, 1
        %s166 = scalar_lea.sflag [#allocation6], %s165
        %s167 = sand.u32 %s54, 1
        %s168 = smul.addr %s167, 16
        %s169 = scalar_lea.vmem [#allocation5], %s168
        // Predicated region
        $region33: #{tpu_custom_call.1} parent=27 // pred_check
          %p170 = pneg %p67
        $region34: #{tpu_custom_call.1} parent=27 // pred_check_branch
          %172 = sbr.rel (%p170) target = $region36
        $region35: #{tpu_custom_call.1} parent=27 // pred_region
          %173 = dma.done %s166, 256
        $region36: #{tpu_custom_call.1} parent=27 // pred_fallthru
          _
        %s174 = sand.u32 %s28, 1
        %s175 = scalar_lea.sflag [#allocation3], %s174
        %s176 = sand.u32 %s28, 1
        %s177 = smul.addr %s176, 16
        %s178 = scalar_lea.vmem [#allocation2], %s177
        %p179 = pneg %p41
        %p180 = pneg %p38
        %s181 = sand.u32 %s54, 1
        %s182 = scalar_lea.sflag [#allocation6], %s181
        %s183 = sand.u32 %s54, 1
        %s184 = smul.addr %s183, 16
        %s185 = scalar_lea.vmem [#allocation5], %s184
        %p186 = pneg %p67
        %p187 = pneg %p64
        %p188 = pneg %p88
        %p189 = pneg %p85
        %s190 = smul.u32 2, %s20
        %s191 = smul.u32 2, %s20
        %p192 = scmp.eq.s32.totalorder %s20, 0
        // Predicated region
        $region37: #{tpu_custom_call.1} parent=27 // pred_check
          %p193 = pneg %p192
        $region38: #{tpu_custom_call.1} parent=27 // pred_check_branch
          %195 = sbr.rel (%p193) target = $region40
        $region39: #{tpu_custom_call.1} parent=27 // pred_region
          %196 = vst [vmem:[#allocation7] sm:$0xff] 0.0
        $region40: #{tpu_custom_call.1} parent=27 // pred_fallthru
          _
        %v197 = vld [vmem:[#allocation7] sm:$0xff]
        %v198 = vld [vmem:[%s160] sm:$0xff]
        %v199 = vld [vmem:[%s160 + $0x8] sm:$0xff]
        %v200 = vld [vmem:[%s169] sm:$0xff]
        %v201 = vld [vmem:[%s169 + $0x8] sm:$0xff]
        %v202 = vsub.f32 %v198, %v200
        %v203 = vsub.f32 %v199, %v201
        %v204 = vand.u32 2147483647, %v202
        %v205 = vand.u32 2147483647, %v203
        %v206 = vadd.f32 %v204, %v205
        %207 = vadd.xlane.f32.xlu0 %v206
        %v208 = vpop.xlane.xlu0 %207
        %v209 = vrot.slane %v208, 4
        %v210 = vadd.f32 %v208, %v209
        %v211 = vrot.slane %v210, 2
        %v212 = vadd.f32 %v210, %v211
        %v213 = vrot.slane %v212, 1
        %v214 = vadd.f32 %v212, %v213
        %s215 = vtos %v214
        %v216 = vstv %s215
        %v217 = vadd.f32 %v197, %v216
        %218 = vst [vmem:[#allocation7] sm:$0xff] %v217
        // Predicated region
        $region41: #{tpu_custom_call.1} parent=27 // pred_check
          %p219 = pneg %p85
        $region42: #{tpu_custom_call.1} parent=27 // pred_check_branch
          %221 = sbr.rel (%p219) target = $region44
        $region43: #{tpu_custom_call.1} parent=27 // pred_region
          %s223 = ssub.s32 128, 128
          %224 = vsyncadd [#allocation4], %s223
          %s226 = sshll.u32 [#allocation7], 4
          %s227 = int_to_ptr.vmem [resolvable:$true] %s226
          %229 = dma.vmem_to_hbm [thread:$0]  %s227, 128, %s2, [#allocation4]
        $region44: #{tpu_custom_call.1} parent=27 // pred_fallthru
          _
        // Predicated region
        $region45: #{tpu_custom_call.1} parent=27 // pred_check
          %p230 = pneg %p85
        $region46: #{tpu_custom_call.1} parent=27 // pred_check_branch
          %232 = sbr.rel (%p230) target = $region48
        $region47: #{tpu_custom_call.1} parent=27 // pred_region
          %233 = dma.done [#allocation4], 128
        $region48: #{tpu_custom_call.1} parent=27 // pred_fallthru
          _
      $region28: #{tpu_custom_call.1} parent=5 // pred_fallthru
        _
      %p234 = scmp.le.s32.totalorder 2, %s15
      // Predicated region
      $region49: #{tpu_custom_call.1} parent=5 // pred_check
        %p235 = pneg %p234
      $region50: #{tpu_custom_call.1} parent=5 // pred_check_branch
        %237 = sbr.rel (%p235) target = $region52
      $region51: #{tpu_custom_call.1} parent=5 // pred_region
        %s238 = ssub.s32 %s15, 2
      $region52: #{tpu_custom_call.1} parent=5 // pred_fallthru
        _
    $region6: #{tpu_custom_call.1} parent=1 // loop_footer
      %s19 = sadd.s32 1, %s15
    $region7: #{tpu_custom_call.1} parent=1 // loop_footer_branch
      %14 = sbr.rel target = $region3
    $region8: #{tpu_custom_call.1} parent=1 // loop_exit
      _
    %239 = vsyncpa [#allocation3], 1
    %s240 = scalar_lea.sflag [#allocation3], 1
    %241 = vsyncpa %s240, 1
    %242 = vsyncpa [#allocation6], 1
    %s243 = scalar_lea.sflag [#allocation6], 1
    %244 = vsyncpa %s243, 1
    %245 = vsyncpa [#allocation4], 1
    %s246 = scalar_lea.sflag [#allocation4], 1
    %247 = vsyncpa %s246, 1

</llo_original>
